<compile_context>
chip_gen: v7x
topology: tpu7x:2x2x1
jax: 0.10.0
libtpu: 0.0.40
codegen_flags: <defaults>
</compile_context>

<pallas_src>
import functools

import jax
import jax.numpy as jnp
from jax.experimental import pallas as pl
from jax.experimental.pallas import tpu as pltpu

# ----------------------- model config (stand-in for self.cfg) -----------------------
NUM_FEATURES = 32      # num_features
NUM_CLASSES = 16       # num_classes
HDIM_SIZE = 32         # cfg('HiddenDimSize')
HIDDEN_DIM = 3         # cfg('HiddenDim')  -> hidden layer l: (HDIM_SIZE+l) -> (HDIM_SIZE+l+1)
DROPOUT = 0.1          # cfg('Dropout')  (identity at inference)
LEAKY_SLOPE = 0.01     # torch.nn.LeakyReLU default negative_slope

D_PAD = 128            # padded feature width for the hidden activations only

assert HIDDEN_DIM >= 2, "folded-layer packing below assumes at least 2 hidden layers"


def _use_bf16_epilogue():
    """bf16 VALU exists on v6e/v7x; v5e (and older) keep the f32 pointwise path."""
    kind = jax.devices()[0].device_kind.lower()
    return ("v6" in kind) or ("v7" in kind)


def _pick_b_tile(batch):
    """Batch-aware tile: prefer >=4 grid steps (2 per v7x TC) for pipelining; cap at
    256 so the activation h stays comfortably within vreg/VMEM without spill."""
    for t in (256, 128):
        if pl.cdiv(batch, t) >= 4:
            return t
    return 128


# ----------------------------------- Pallas kernel -----------------------------------
def multilinear_kernel(x_ref, w0_ref, b0_ref, w_hid_ref, b_hid_ref,
                       w_out_ref, b_out_ref, o_ref, *, num_extra_hidden, act_dtype):
    # Fused (fc_lin + hidden layer 0):  x @ (W_in @ W_h0) + (b_in @ W_h0 + b_h0)
    # x may arrive as f32 or bf16; the cast is a no-op in the latter case.
    x = x_ref[...].astype(jnp.bfloat16)                       # (b_tile, 32)
    h = jnp.dot(x, w0_ref[...], preferred_element_type=jnp.float32).astype(act_dtype)
    h = h + b0_ref[...]                                       # bias stored in act_dtype
    h = jnp.maximum(h, LEAKY_SLOPE * h)                       # LeakyReLU

    # Remaining hidden layers 1 .. HIDDEN_DIM-1  (Dropout1d is identity at inference)
    for l in range(num_extra_hidden):                         # small static -> unrolled
        h = jnp.dot(h.astype(jnp.bfloat16), w_hid_ref[l],
                    preferred_element_type=jnp.float32).astype(act_dtype)
        h = h + b_hid_ref[l][None, :]
        h = jnp.maximum(h, LEAKY_SLOPE * h)

    # fc_lout: narrow (NUM_CLASSES-wide) output, f32.
    z = jnp.dot(h.astype(jnp.bfloat16), w_out_ref[...],
                preferred_element_type=jnp.float32)
    o_ref[...] = z + b_out_ref[...]


def multilinear_forward(x, packed, act_dtype, b_tile=None):
    """x: (B, NUM_FEATURES) f32 or bf16.  Returns (B, NUM_CLASSES) f32."""
    w0, b0, w_hid, b_hid, w_out, b_out = packed
    B = x.shape[0]
    if b_tile is None:
        b_tile = _pick_b_tile(B)
    n_tiles = pl.cdiv(B, b_tile)   # ragged last block handled by Pallas (no zero-pad copy)

    kernel = functools.partial(multilinear_kernel,
                               num_extra_hidden=HIDDEN_DIM - 1,
                               act_dtype=act_dtype)

    out = pl.pallas_call(
        kernel,
        out_shape=jax.ShapeDtypeStruct((B, NUM_CLASSES), jnp.float32),
        grid_spec=pltpu.PrefetchScalarGridSpec(
            num_scalar_prefetch=0,
            grid=(n_tiles,),
            in_specs=[
                pl.BlockSpec((b_tile, NUM_FEATURES), lambda i: (i, 0)),              # x (unpadded K)
                pl.BlockSpec((NUM_FEATURES, D_PAD), lambda i: (0, 0)),               # folded w0 (bf16)
                pl.BlockSpec((1, D_PAD), lambda i: (0, 0)),                          # folded b0
                pl.BlockSpec((HIDDEN_DIM - 1, D_PAD, D_PAD), lambda i: (0, 0, 0)),   # w_hid[1:] (bf16)
                pl.BlockSpec((HIDDEN_DIM - 1, D_PAD), lambda i: (0, 0)),             # b_hid[1:]
                pl.BlockSpec((D_PAD, NUM_CLASSES), lambda i: (0, 0)),                # w_out (bf16, narrow N)
                pl.BlockSpec((1, NUM_CLASSES), lambda i: (0, 0)),                    # b_out (f32)
            ],
            out_specs=pl.BlockSpec((b_tile, NUM_CLASSES), lambda i: (i, 0)),
        ),
        compiler_params=pltpu.CompilerParams(
            dimension_semantics=("parallel",)),   # shards batch tiles across v7x TCs
        # Weights are ~80 KB resident and tiles <= ~50 KB double-buffered: far under the
        # scoped-VMEM default on every generation, so no vmem_limit_bytes is needed and
        # single-buffering the grid-invariant operands would not change anything here.
    )(x, w0, b0, w_hid, b_hid, w_out, b_out)

    return out


# -------------------------------- parameter construction --------------------------------
def _linear_init(key, fan_in, fan_out):
    """torch.nn.Linear-style uniform(-1/sqrt(in), 1/sqrt(in)) init, deterministic.
    Weight is stored already transposed: (in, out), so forward is x @ W + b."""
    kw, kb = jax.random.split(key)
    bound = 1.0 / jnp.sqrt(jnp.float32(fan_in))
    w = jax.random.uniform(kw, (fan_in, fan_out), jnp.float32, -bound, bound)
    b = jax.random.uniform(kb, (fan_out,), jnp.float32, -bound, bound)
    return w, b


def make_params(key):
    """Raw (unpadded, unfused, f32) parameters matching the torch module structure."""
    keys = jax.random.split(key, 2 + HIDDEN_DIM)

    w_in, b_in = _linear_init(keys[0], NUM_FEATURES, HDIM_SIZE)          # fc_lin

    w_hid, b_hid = [], []
    for l in range(HIDDEN_DIM):                                          # seq layers
        fin, fout = HDIM_SIZE + l, HDIM_SIZE + l + 1
        w, b = _linear_init(keys[1 + l], fin, fout)
        w_hid.append(w)
        b_hid.append(b)

    fin = HDIM_SIZE + HIDDEN_DIM
    w_out, b_out = _linear_init(keys[1 + HIDDEN_DIM], fin, NUM_CLASSES)  # fc_lout
    return w_in, b_in, w_hid, b_hid, w_out, b_out


def pack_params(raw, act_dtype):
    """Fold fc_lin into hidden layer 0, pad hidden dims to D_PAD, cast weights to bf16.
    Hidden-layer biases are stored in act_dtype (bf16 on v6e/v7x, f32 on v5e);
    fc_lout stays narrow (NUM_CLASSES columns) and its bias stays f32."""
    w_in, b_in, w_hid, b_hid, w_out, b_out = raw

    # Fold (done in f32, offline): no nonlinearity between fc_lin and hidden layer 0.
    w0 = w_in @ w_hid[0]                     # (NUM_FEATURES, HDIM_SIZE+1)
    b0 = b_in @ w_hid[0] + b_hid[0]          # (HDIM_SIZE+1,)

    fout0 = HDIM_SIZE + 1
    w0_p = jnp.zeros((NUM_FEATURES, D_PAD), jnp.float32).at[:, :fout0].set(w0)
    b0_p = jnp.zeros((1, D_PAD), jnp.float32).at[0, :fout0].set(b0)

    w_hid_p = jnp.zeros((HIDDEN_DIM - 1, D_PAD, D_PAD), jnp.float32)
    b_hid_p = jnp.zeros((HIDDEN_DIM - 1, D_PAD), jnp.float32)
    for l in range(1, HIDDEN_DIM):
        fin, fout = HDIM_SIZE + l, HDIM_SIZE + l + 1
        w_hid_p = w_hid_p.at[l - 1, :fin, :fout].set(w_hid[l])
        b_hid_p = b_hid_p.at[l - 1, :fout].set(b_hid[l])

    fin = HDIM_SIZE + HIDDEN_DIM
    w_out_p = jnp.zeros((D_PAD, NUM_CLASSES), jnp.float32).at[:fin, :].set(w_out)
    b_out_p = b_out.reshape(1, NUM_CLASSES)

    # bf16 weights (zero padding is exact in bf16); hidden biases in act_dtype.
    return (w0_p.astype(jnp.bfloat16), b0_p.astype(act_dtype),
            w_hid_p.astype(jnp.bfloat16), b_hid_p.astype(act_dtype),
            w_out_p.astype(jnp.bfloat16), b_out_p)


# -------------------------------------- reference --------------------------------------
def reference_forward(x, raw):
    """Exact f32 re-implementation of the torch forward (eval mode)."""
    w_in, b_in, w_hid, b_hid, w_out, b_out = raw
    h = x @ w_in + b_in                                       # fc_lin
    for l in range(HIDDEN_DIM):                               # seq: Linear+LeakyReLU(+Dropout=id)
        h = h @ w_hid[l] + b_hid[l]
        h = jnp.where(h >= 0, h, LEAKY_SLOPE * h)
    return h @ w_out + b_out                                  # fc_lout
# TODO(synk): training-mode Dropout1d (PRNG channel masking) is not implemented;
# this kernel covers the inference forward pass only.


# ---------------------------------------- main ----------------------------------------
if __name__ == "__main__":
    key = jax.random.PRNGKey(0)
    kx, kp = jax.random.split(key)

    BATCH = 512  # -> b_tile=128, 4 grid steps: pipelining + both v7x TCs exercised
    x = jax.random.normal(kx, (BATCH, NUM_FEATURES), jnp.float32)

    act_dtype = jnp.bfloat16 if _use_bf16_epilogue() else jnp.float32

    raw_params = make_params(kp)
    packed_params = pack_params(raw_params, act_dtype)

    out = multilinear_forward(x, packed_params, act_dtype)
    out = jax.block_until_ready(out)

    ref = reference_forward(x, raw_params)
    assert out.shape == (BATCH, NUM_CLASSES)
    # bf16 weights / (possibly) bf16 pointwise epilogue -> allow ~1e-2-level deviation.
    assert jnp.allclose(out, ref, atol=5e-2, rtol=5e-2), float(jnp.max(jnp.abs(out - ref)))

    print("KERNEL_OK")
</pallas_src>

<mosaic_0001>
module attributes {stable_mosaic.version = 11 : i64} {
  func.func @multilinear_kernel(%arg0: i32, %arg1: memref<128x32xf32, #tpu.memory_space<vmem>>, %arg2: memref<32x128xbf16, #tpu.memory_space<vmem>>, %arg3: memref<1x128xf32, #tpu.memory_space<vmem>>, %arg4: memref<2x128x128xbf16, #tpu.memory_space<vmem>>, %arg5: memref<2x128xf32, #tpu.memory_space<vmem>>, %arg6: memref<128x16xbf16, #tpu.memory_space<vmem>>, %arg7: memref<1x16xf32, #tpu.memory_space<vmem>>, %arg8: memref<128x16xf32, #tpu.memory_space<vmem>>) attributes {dimension_semantics = [#tpu.dimension_semantics<parallel>], iteration_bounds = array<i64: 4>, scalar_prefetch = 0 : i64, scratch_operands = 0 : i64, tpu.core_type = #tpu.core_type<tc>, window_params = [{transform_indices = @transform_0, window_bounds = array<i64: 128, 32>}, {pipeline_mode = #tpu.pipeline_mode<synchronous>, transform_indices = @transform_1, window_bounds = array<i64: 32, 128>}, {pipeline_mode = #tpu.pipeline_mode<synchronous>, transform_indices = @transform_2, window_bounds = array<i64: 1, 128>}, {pipeline_mode = #tpu.pipeline_mode<synchronous>, transform_indices = @transform_3, window_bounds = array<i64: 2, 128, 128>}, {pipeline_mode = #tpu.pipeline_mode<synchronous>, transform_indices = @transform_4, window_bounds = array<i64: 2, 128>}, {pipeline_mode = #tpu.pipeline_mode<synchronous>, transform_indices = @transform_5, window_bounds = array<i64: 128, 16>}, {pipeline_mode = #tpu.pipeline_mode<synchronous>, transform_indices = @transform_6, window_bounds = array<i64: 1, 16>}, {transform_indices = @transform_7, window_bounds = array<i64: 128, 16>}]} {
    %c0 = arith.constant 0 : index
    %c0_0 = arith.constant 0 : index
    %0 = vector.load %arg1[%c0, %c0_0] : memref<128x32xf32, #tpu.memory_space<vmem>>, vector<128x32xf32>
    %1 = arith.truncf %0 : vector<128x32xf32> to vector<128x32xbf16>
    %c0_1 = arith.constant 0 : index
    %c0_2 = arith.constant 0 : index
    %2 = vector.load %arg2[%c0_1, %c0_2] : memref<32x128xbf16, #tpu.memory_space<vmem>>, vector<32x128xbf16>
    %cst = arith.constant dense<0.000000e+00> : vector<128x128xf32>
    %3 = tpu.matmul %1, %2, %cst {dimension_numbers = #tpu.dot_dimension_numbers<[1], [0], [0], [1], [0, 0, 1, 1], [], []>} : vector<128x32xbf16>, vector<32x128xbf16>, vector<128x128xf32> -> vector<128x128xf32>
    %c0_3 = arith.constant 0 : index
    %c0_4 = arith.constant 0 : index
    %4 = vector.load %arg3[%c0_3, %c0_4] : memref<1x128xf32, #tpu.memory_space<vmem>>, vector<1x128xf32>
    %5 = vector.broadcast %4 : vector<1x128xf32> to vector<128x128xf32>
    %6 = arith.addf %3, %5 : vector<128x128xf32>
    %cst_5 = arith.constant 0.00999999977 : f32
    %7 = vector.broadcast %cst_5 : f32 to vector<128x128xf32>
    %8 = arith.mulf %7, %6 : vector<128x128xf32>
    %9 = arith.maximumf %6, %8 : vector<128x128xf32>
    %10 = arith.truncf %9 : vector<128x128xf32> to vector<128x128xbf16>
    %c0_6 = arith.constant 0 : index
    %c0_7 = arith.constant 0 : index
    %c0_8 = arith.constant 0 : index
    %11 = vector.load %arg4[%c0_6, %c0_7, %c0_8] : memref<2x128x128xbf16, #tpu.memory_space<vmem>>, vector<1x128x128xbf16>
    %12 = vector.shape_cast %11 : vector<1x128x128xbf16> to vector<128x128xbf16>
    %cst_9 = arith.constant dense<0.000000e+00> : vector<128x128xf32>
    %13 = tpu.matmul %10, %12, %cst_9 {dimension_numbers = #tpu.dot_dimension_numbers<[1], [0], [0], [1], [0, 0, 1, 1], [], []>} : vector<128x128xbf16>, vector<128x128xbf16>, vector<128x128xf32> -> vector<128x128xf32>
    %c0_10 = arith.constant 0 : index
    %c0_11 = arith.constant 0 : index
    %14 = vector.load %arg5[%c0_10, %c0_11] : memref<2x128xf32, #tpu.memory_space<vmem>>, vector<1x128xf32>
    %15 = vector.shape_cast %14 : vector<1x128xf32> to vector<128xf32>
    %16 = vector.shape_cast %15 : vector<128xf32> to vector<1x128xf32>
    %17 = vector.broadcast %16 : vector<1x128xf32> to vector<128x128xf32>
    %18 = arith.addf %13, %17 : vector<128x128xf32>
    %cst_12 = arith.constant 0.00999999977 : f32
    %19 = vector.broadcast %cst_12 : f32 to vector<128x128xf32>
    %20 = arith.mulf %19, %18 : vector<128x128xf32>
    %21 = arith.maximumf %18, %20 : vector<128x128xf32>
    %22 = arith.truncf %21 : vector<128x128xf32> to vector<128x128xbf16>
    %c1 = arith.constant 1 : index
    %c0_13 = arith.constant 0 : index
    %c0_14 = arith.constant 0 : index
    %23 = vector.load %arg4[%c1, %c0_13, %c0_14] : memref<2x128x128xbf16, #tpu.memory_space<vmem>>, vector<1x128x128xbf16>
    %24 = vector.shape_cast %23 : vector<1x128x128xbf16> to vector<128x128xbf16>
    %cst_15 = arith.constant dense<0.000000e+00> : vector<128x128xf32>
    %25 = tpu.matmul %22, %24, %cst_15 {dimension_numbers = #tpu.dot_dimension_numbers<[1], [0], [0], [1], [0, 0, 1, 1], [], []>} : vector<128x128xbf16>, vector<128x128xbf16>, vector<128x128xf32> -> vector<128x128xf32>
    %c1_16 = arith.constant 1 : index
    %c0_17 = arith.constant 0 : index
    %26 = vector.load %arg5[%c1_16, %c0_17] : memref<2x128xf32, #tpu.memory_space<vmem>>, vector<1x128xf32>
    %27 = vector.shape_cast %26 : vector<1x128xf32> to vector<128xf32>
    %28 = vector.shape_cast %27 : vector<128xf32> to vector<1x128xf32>
    %29 = vector.broadcast %28 : vector<1x128xf32> to vector<128x128xf32>
    %30 = arith.addf %25, %29 : vector<128x128xf32>
    %cst_18 = arith.constant 0.00999999977 : f32
    %31 = vector.broadcast %cst_18 : f32 to vector<128x128xf32>
    %32 = arith.mulf %31, %30 : vector<128x128xf32>
    %33 = arith.maximumf %30, %32 : vector<128x128xf32>
    %34 = arith.truncf %33 : vector<128x128xf32> to vector<128x128xbf16>
    %c0_19 = arith.constant 0 : index
    %c0_20 = arith.constant 0 : index
    %35 = vector.load %arg6[%c0_19, %c0_20] : memref<128x16xbf16, #tpu.memory_space<vmem>>, vector<128x16xbf16>
    %cst_21 = arith.constant dense<0.000000e+00> : vector<128x16xf32>
    %36 = tpu.matmul %34, %35, %cst_21 {dimension_numbers = #tpu.dot_dimension_numbers<[1], [0], [0], [1], [0, 0, 1, 1], [], []>} : vector<128x128xbf16>, vector<128x16xbf16>, vector<128x16xf32> -> vector<128x16xf32>
    %c0_22 = arith.constant 0 : index
    %c0_23 = arith.constant 0 : index
    %37 = vector.load %arg7[%c0_22, %c0_23] : memref<1x16xf32, #tpu.memory_space<vmem>>, vector<1x16xf32>
    %38 = vector.broadcast %37 : vector<1x16xf32> to vector<128x16xf32>
    %39 = arith.addf %36, %38 : vector<128x16xf32>
    %c0_24 = arith.constant 0 : index
    %c0_25 = arith.constant 0 : index
    %40 = vector.load %arg8[%c0_24, %c0_25] : memref<128x16xf32, #tpu.memory_space<vmem>>, vector<128x16xf32>
    tpu.vector_store %arg8[%c0_24, %c0_25], %39 {strides = array<i32>} : memref<128x16xf32, #tpu.memory_space<vmem>>, vector<128x16xf32>,
    return
  }
  func.func @transform_0(%arg0: i32) -> (i32, i32) {
    %c0_i32 = arith.constant 0 : i32
    %c0_i32_0 = arith.constant 0 : i32
    return %arg0, %c0_i32 : i32, i32
  }
  func.func @transform_1(%arg0: i32) -> (i32, i32) {
    %c0_i32 = arith.constant 0 : i32
    %c0_i32_0 = arith.constant 0 : i32
    %c0_i32_1 = arith.constant 0 : i32
    return %c0_i32, %c0_i32_0 : i32, i32
  }
  func.func @transform_2(%arg0: i32) -> (i32, i32) {
    %c0_i32 = arith.constant 0 : i32
    %c0_i32_0 = arith.constant 0 : i32
    %c0_i32_1 = arith.constant 0 : i32
    return %c0_i32, %c0_i32_0 : i32, i32
  }
  func.func @transform_3(%arg0: i32) -> (i32, i32, i32) {
    %c0_i32 = arith.constant 0 : i32
    %c0_i32_0 = arith.constant 0 : i32
    %c0_i32_1 = arith.constant 0 : i32
    %c0_i32_2 = arith.constant 0 : i32
    return %c0_i32, %c0_i32_0, %c0_i32_1 : i32, i32, i32
  }
  func.func @transform_4(%arg0: i32) -> (i32, i32) {
    %c0_i32 = arith.constant 0 : i32
    %c0_i32_0 = arith.constant 0 : i32
    %c0_i32_1 = arith.constant 0 : i32
    return %c0_i32, %c0_i32_0 : i32, i32
  }
  func.func @transform_5(%arg0: i32) -> (i32, i32) {
    %c0_i32 = arith.constant 0 : i32
    %c0_i32_0 = arith.constant 0 : i32
    %c0_i32_1 = arith.constant 0 : i32
    return %c0_i32, %c0_i32_0 : i32, i32
  }
  func.func @transform_6(%arg0: i32) -> (i32, i32) {
    %c0_i32 = arith.constant 0 : i32
    %c0_i32_0 = arith.constant 0 : i32
    %c0_i32_1 = arith.constant 0 : i32
    return %c0_i32, %c0_i32_0 : i32, i32
  }
  func.func @transform_7(%arg0: i32) -> (i32, i32) {
    %c0_i32 = arith.constant 0 : i32
    %c0_i32_0 = arith.constant 0 : i32
    return %arg0, %c0_i32 : i32, i32
  }
}

</mosaic_0001>

<llo_original>
// kernel: tpu_custom_call.1
$region0: #{tpu_custom_call.1}
  #allocation0 [shape = 'u32[]', space=smem, size = 0x4, offset = 0x4, fixed_abs, tag = 'smem constant byte address 0x4 - core index']
  #allocation1 [shape = 'u32[144,128]{1,0:T(1,128)}', space=vmem, size = 0x12000, scoped, tag = 'internal scratch']
  %s0 = inlined_call_operand.vmem [shape: f32[512,32], index: 0, kind: input, shape index: {}]
  %s1 = inlined_call_operand.vmem [shape: bf16[32,128], index: 1, kind: input, shape index: {}]
  %s2 = inlined_call_operand.vmem [shape: f32[1,128], index: 2, kind: input, shape index: {}]
  %s3 = inlined_call_operand.vmem [shape: bf16[2,128,128], index: 3, kind: input, shape index: {}]
  %s4 = inlined_call_operand.vmem [shape: f32[2,128], index: 4, kind: input, shape index: {}]
  %s5 = inlined_call_operand.vmem [shape: bf16[128,16], index: 5, kind: input, shape index: {}]
  %s6 = inlined_call_operand.vmem [shape: f32[1,16], index: 6, kind: input, shape index: {}]
  %s7 = inlined_call_operand.vmem [shape: f32[512,16], index: 7, kind: output, shape index: {}]
  %s8 = sld [smem:[#allocation0]]
  $region61: #{tpu_custom_call.1} parent=0
    _
  %s10 = ssub.s32 1, %s8
  %s11 = scalar_select 0, %s10, %s8
  loop: start=0, step=1, limit=6
  $region2: #{tpu_custom_call.1} parent=0 // loop_pre_header
    _
  $region3: #{tpu_custom_call.1} parent=0 // loop_header
    %s13 = sphi 0, %s17
    %p14 = scmp.ge.s32.totalorder %s13, 6
    %s23 = sphi 0, %s25
    %s26 = sphi 0, %s23
    %s27 = sphi 0, %s26
    %s43 = sphi 0, %s27
    %s47 = sphi 0, %s47
    %s49 = sphi 0, %s47
    %s50 = sphi 0, %s49
    %s64 = sphi 0, %s50
    %s68 = sphi 0, %s68
    %s70 = sphi 0, %s68
    %s71 = sphi 0, %s70
    %s85 = sphi 0, %s71
    %s89 = sphi 0, %s89
    %s91 = sphi 0, %s89
    %s92 = sphi 0, %s91
    %s106 = sphi 0, %s92
    %s110 = sphi 0, %s110
    %s112 = sphi 0, %s110
    %s113 = sphi 0, %s112
    %s127 = sphi 0, %s113
    %s131 = sphi 0, %s131
    %s133 = sphi 0, %s131
    %s134 = sphi 0, %s133
    %s148 = sphi 0, %s134
    %s152 = sphi 0, %s152
    %s154 = sphi 0, %s152
    %s155 = sphi 0, %s154
    %s169 = sphi 0, %s155
    %s175 = sphi 0, %s177
    %s178 = sphi 0, %s175
    %s179 = sphi 0, %s178
    %s195 = sphi 0, %s179
  $region4: #{tpu_custom_call.1} parent=0 // loop_header_branch
    %16 = sbr.rel (%p14) target = $region8
  $region5: #{tpu_custom_call.1} parent=0 // loop_body
    %s18 = ssub.s32 %s13, 1
    %s19 = ssub.s32 %s13, 2
    %s20 = sadd.s32 %s13, 1
    %s21 = ssub.s32 %s13, %s20
    %p22 = scmp.eq.s32.totalorder %s21, 0
    %s24 = sadd.s32 %s23, 1
    %s25 = scalar_select %p22, %s23, %s24
    %p28 = pneg %p22
    %p29 = scmp.eq.s32.totalorder %s13, 3
    %p30 = por %p28, %p29
    %p31 = scmp.ne.s32.totalorder %s23, %s26
    %p32 = scmp.eq.s32.totalorder %s13, 0
    %p33 = por %p31, %p32
    %p34 = scmp.ne.s32.totalorder %s23, %s26
    %p35 = scmp.eq.s32.totalorder %s18, 3
    %p36 = por %p34, %p35
    %p37 = scmp.ne.s32.totalorder %s26, %s27
    %p38 = scmp.eq.s32.totalorder %s18, 0
    %p39 = por %p37, %p38
    %p40 = scmp.ne.s32.totalorder %s26, %s27
    %p41 = scmp.eq.s32.totalorder %s19, 3
    %p42 = por %p40, %p41
    %p44 = scmp.ne.s32.totalorder %s27, %s43
    %p45 = scmp.eq.s32.totalorder %s19, 0
    %p46 = por %p44, %p45
    %s48 = sadd.s32 %s47, 1
    %p51 = scmp.eq.s32.totalorder %s13, 3
    %p52 = scmp.ne.s32.totalorder %s47, %s49
    %p53 = scmp.eq.s32.totalorder %s13, 0
    %p54 = por %p52, %p53
    %p55 = scmp.ne.s32.totalorder %s47, %s49
    %p56 = scmp.eq.s32.totalorder %s18, 3
    %p57 = por %p55, %p56
    %p58 = scmp.ne.s32.totalorder %s49, %s50
    %p59 = scmp.eq.s32.totalorder %s18, 0
    %p60 = por %p58, %p59
    %p61 = scmp.ne.s32.totalorder %s49, %s50
    %p62 = scmp.eq.s32.totalorder %s19, 3
    %p63 = por %p61, %p62
    %p65 = scmp.ne.s32.totalorder %s50, %s64
    %p66 = scmp.eq.s32.totalorder %s19, 0
    %p67 = por %p65, %p66
    %s69 = sadd.s32 %s68, 1
    %p72 = scmp.eq.s32.totalorder %s13, 3
    %p73 = scmp.ne.s32.totalorder %s68, %s70
    %p74 = scmp.eq.s32.totalorder %s13, 0
    %p75 = por %p73, %p74
    %p76 = scmp.ne.s32.totalorder %s68, %s70
    %p77 = scmp.eq.s32.totalorder %s18, 3
    %p78 = por %p76, %p77
    %p79 = scmp.ne.s32.totalorder %s70, %s71
    %p80 = scmp.eq.s32.totalorder %s18, 0
    %p81 = por %p79, %p80
    %p82 = scmp.ne.s32.totalorder %s70, %s71
    %p83 = scmp.eq.s32.totalorder %s19, 3
    %p84 = por %p82, %p83
    %p86 = scmp.ne.s32.totalorder %s71, %s85
    %p87 = scmp.eq.s32.totalorder %s19, 0
    %p88 = por %p86, %p87
    %s90 = sadd.s32 %s89, 1
    %p93 = scmp.eq.s32.totalorder %s13, 3
    %p94 = scmp.ne.s32.totalorder %s89, %s91
    %p95 = scmp.eq.s32.totalorder %s13, 0
    %p96 = por %p94, %p95
    %p97 = scmp.ne.s32.totalorder %s89, %s91
    %p98 = scmp.eq.s32.totalorder %s18, 3
    %p99 = por %p97, %p98
    %p100 = scmp.ne.s32.totalorder %s91, %s92
    %p101 = scmp.eq.s32.totalorder %s18, 0
    %p102 = por %p100, %p101
    %p103 = scmp.ne.s32.totalorder %s91, %s92
    %p104 = scmp.eq.s32.totalorder %s19, 3
    %p105 = por %p103, %p104
    %p107 = scmp.ne.s32.totalorder %s92, %s106
    %p108 = scmp.eq.s32.totalorder %s19, 0
    %p109 = por %p107, %p108
    %s111 = sadd.s32 %s110, 1
    %p114 = scmp.eq.s32.totalorder %s13, 3
    %p115 = scmp.ne.s32.totalorder %s110, %s112
    %p116 = scmp.eq.s32.totalorder %s13, 0
    %p117 = por %p115, %p116
    %p118 = scmp.ne.s32.totalorder %s110, %s112
    %p119 = scmp.eq.s32.totalorder %s18, 3
    %p120 = por %p118, %p119
    %p121 = scmp.ne.s32.totalorder %s112, %s113
    %p122 = scmp.eq.s32.totalorder %s18, 0
    %p123 = por %p121, %p122
    %p124 = scmp.ne.s32.totalorder %s112, %s113
    %p125 = scmp.eq.s32.totalorder %s19, 3
    %p126 = por %p124, %p125
    %p128 = scmp.ne.s32.totalorder %s113, %s127
    %p129 = scmp.eq.s32.totalorder %s19, 0
    %p130 = por %p128, %p129
    %s132 = sadd.s32 %s131, 1
    %p135 = scmp.eq.s32.totalorder %s13, 3
    %p136 = scmp.ne.s32.totalorder %s131, %s133
    %p137 = scmp.eq.s32.totalorder %s13, 0
    %p138 = por %p136, %p137
    %p139 = scmp.ne.s32.totalorder %s131, %s133
    %p140 = scmp.eq.s32.totalorder %s18, 3
    %p141 = por %p139, %p140
    %p142 = scmp.ne.s32.totalorder %s133, %s134
    %p143 = scmp.eq.s32.totalorder %s18, 0
    %p144 = por %p142, %p143
    %p145 = scmp.ne.s32.totalorder %s133, %s134
    %p146 = scmp.eq.s32.totalorder %s19, 3
    %p147 = por %p145, %p146
    %p149 = scmp.ne.s32.totalorder %s134, %s148
    %p150 = scmp.eq.s32.totalorder %s19, 0
    %p151 = por %p149, %p150
    %s153 = sadd.s32 %s152, 1
    %p156 = scmp.eq.s32.totalorder %s13, 3
    %p157 = scmp.ne.s32.totalorder %s152, %s154
    %p158 = scmp.eq.s32.totalorder %s13, 0
    %p159 = por %p157, %p158
    %p160 = scmp.ne.s32.totalorder %s152, %s154
    %p161 = scmp.eq.s32.totalorder %s18, 3
    %p162 = por %p160, %p161
    %p163 = scmp.ne.s32.totalorder %s154, %s155
    %p164 = scmp.eq.s32.totalorder %s18, 0
    %p165 = por %p163, %p164
    %p166 = scmp.ne.s32.totalorder %s154, %s155
    %p167 = scmp.eq.s32.totalorder %s19, 3
    %p168 = por %p166, %p167
    %p170 = scmp.ne.s32.totalorder %s155, %s169
    %p171 = scmp.eq.s32.totalorder %s19, 0
    %p172 = por %p170, %p171
    %s173 = ssub.s32 %s13, %s20
    %p174 = scmp.eq.s32.totalorder %s173, 0
    %s176 = sadd.s32 %s175, 1
    %s177 = scalar_select %p174, %s175, %s176
    %p180 = pneg %p174
    %p181 = scmp.eq.s32.totalorder %s13, 3
    %p182 = por %p180, %p181
    %p183 = scmp.ne.s32.totalorder %s175, %s178
    %p184 = scmp.eq.s32.totalorder %s13, 0
    %p185 = por %p183, %p184
    %p186 = scmp.ne.s32.totalorder %s175, %s178
    %p187 = scmp.eq.s32.totalorder %s18, 3
    %p188 = por %p186, %p187
    %p189 = scmp.ne.s32.totalorder %s178, %s179
    %p190 = scmp.eq.s32.totalorder %s18, 0
    %p191 = por %p189, %p190
    %p192 = scmp.ne.s32.totalorder %s178, %s179
    %p193 = scmp.eq.s32.totalorder %s19, 3
    %p194 = por %p192, %p193
    %p196 = scmp.ne.s32.totalorder %s179, %s195
    %p197 = scmp.eq.s32.totalorder %s19, 0
    %p198 = por %p196, %p197
    %p199 = scmp.le.s32.totalorder 1, %s13
    %p200 = scmp.lt.s32.totalorder %s13, 5
    %p201 = pnand %p199, %p200
    %p202 = pneg %p201
    // Predicated region
    $region9: #{tpu_custom_call.1} parent=5 // pred_check
      _
    $region10: #{tpu_custom_call.1} parent=5 // pred_check_branch
      %204 = sbr.rel (%p201) target = $region12
    $region11: #{tpu_custom_call.1} parent=5 // pred_region
      %s205 = ssub.s32 %s13, 1
      // Predicated region
      $region13: #{tpu_custom_call.1} parent=11 // pred_check
        %p206 = pneg %p60
      $region14: #{tpu_custom_call.1} parent=11 // pred_check_branch
        %208 = sbr.rel (%p206) target = $region16
      $region15: #{tpu_custom_call.1} parent=11 // pred_region
        _
      $region16: #{tpu_custom_call.1} parent=11 // pred_fallthru
        _
      // Predicated region
      $region17: #{tpu_custom_call.1} parent=11 // pred_check
        %p209 = pneg %p81
      $region18: #{tpu_custom_call.1} parent=11 // pred_check_branch
        %211 = sbr.rel (%p209) target = $region20
      $region19: #{tpu_custom_call.1} parent=11 // pred_region
        _
      $region20: #{tpu_custom_call.1} parent=11 // pred_fallthru
        _
      // Predicated region
      $region21: #{tpu_custom_call.1} parent=11 // pred_check
        %p212 = pneg %p102
      $region22: #{tpu_custom_call.1} parent=11 // pred_check_branch
        %214 = sbr.rel (%p212) target = $region24
      $region23: #{tpu_custom_call.1} parent=11 // pred_region
        _
      $region24: #{tpu_custom_call.1} parent=11 // pred_fallthru
        _
      // Predicated region
      $region25: #{tpu_custom_call.1} parent=11 // pred_check
        %p215 = pneg %p123
      $region26: #{tpu_custom_call.1} parent=11 // pred_check_branch
        %217 = sbr.rel (%p215) target = $region28
      $region27: #{tpu_custom_call.1} parent=11 // pred_region
        _
      $region28: #{tpu_custom_call.1} parent=11 // pred_fallthru
        _
      // Predicated region
      $region29: #{tpu_custom_call.1} parent=11 // pred_check
        %p218 = pneg %p144
      $region30: #{tpu_custom_call.1} parent=11 // pred_check_branch
        %220 = sbr.rel (%p218) target = $region32
      $region31: #{tpu_custom_call.1} parent=11 // pred_region
        _
      $region32: #{tpu_custom_call.1} parent=11 // pred_fallthru
        _
      // Predicated region
      $region33: #{tpu_custom_call.1} parent=11 // pred_check
        %p221 = pneg %p165
      $region34: #{tpu_custom_call.1} parent=11 // pred_check_branch
        %223 = sbr.rel (%p221) target = $region36
      $region35: #{tpu_custom_call.1} parent=11 // pred_region
        _
      $region36: #{tpu_custom_call.1} parent=11 // pred_fallthru
        _
    $region12: #{tpu_custom_call.1} parent=5 // pred_fallthru
      _
    %p224 = scmp.lt.s32.totalorder %s13, 4
    // Predicated region
    $region37: #{tpu_custom_call.1} parent=5 // pred_check
      %p225 = pneg %p224
    $region38: #{tpu_custom_call.1} parent=5 // pred_check_branch
      %227 = sbr.rel (%p225) target = $region40
    $region39: #{tpu_custom_call.1} parent=5 // pred_region
      // Predicated region
      $region41: #{tpu_custom_call.1} parent=39 // pred_check
        %p228 = pneg %p33
      $region42: #{tpu_custom_call.1} parent=39 // pred_check_branch
        %230 = sbr.rel (%p228) target = $region44
      $region43: #{tpu_custom_call.1} parent=39 // pred_region
        %s231 = smul.u32 16, %s13
        %p232 = scmp.lt.s32.totalorder %s231, 63
        %s233 = scalar_select %p232, %s231, 63
        %s234 = smul.addr %s233, 8
        %s235 = scalar_lea.vmem %s0, %s234
        %s236 = smul.u32 16, %s13
      $region44: #{tpu_custom_call.1} parent=39 // pred_fallthru
        _
    $region40: #{tpu_custom_call.1} parent=5 // pred_fallthru
      _
    %p237 = scmp.le.s32.totalorder 1, %s13
    %p238 = scmp.lt.s32.totalorder %s13, 5
    %p239 = pnand %p237, %p238
    %p240 = pneg %p239
    // Predicated region
    $region45: #{tpu_custom_call.1} parent=5 // pred_check
      _
    $region46: #{tpu_custom_call.1} parent=5 // pred_check_branch
      %242 = sbr.rel (%p239) target = $region48
    $region47: #{tpu_custom_call.1} parent=5 // pred_region
      %s243 = ssub.s32 %s13, 1
      %s244 = smul.u32 16, %s18
      %p245 = scmp.lt.s32.totalorder %s244, 63
      %s246 = scalar_select %p245, %s244, 63
      %s247 = smul.addr %s246, 8
      %s248 = scalar_lea.vmem %s0, %s247
      %p249 = pneg %p39
      %p250 = pneg %p36
      %p251 = pneg %p60
      %p252 = pneg %p57
      %p253 = pneg %p81
      %p254 = pneg %p78
      %p255 = pneg %p102
      %p256 = pneg %p99
      %p257 = pneg %p123
      %p258 = pneg %p120
      %p259 = pneg %p144
      %p260 = pneg %p141
      %p261 = pneg %p165
      %p262 = pneg %p162
      %p263 = pneg %p191
      %p264 = pneg %p188
      %s265 = smul.u32 16, %s18
      %p266 = scmp.lt.s32.totalorder %s265, 63
      %s267 = scalar_select %p266, %s265, 63
      %s268 = smul.addr %s267, 8
      %s269 = scalar_lea.vmem %s7, %s268
      %s270 = smul.u32 16, %s18
      %p271 = scmp.lt.s32.totalorder %s270, 63
      %s272 = scalar_select %p271, %s270, 63
      %s273 = smul.addr %s272, 8
      %s274 = scalar_lea.vmem %s0, %s273
      %s275 = smul.u32 16, %s18
      %s276 = smul.u32 16, %s18
      %p277 = scmp.lt.s32.totalorder %s276, 63
      %s278 = scalar_select %p277, %s276, 63
      %s279 = smul.addr %s278, 8
      %s280 = scalar_lea.vmem %s7, %s279
      %s281 = smul.u32 16, %s18
      %v283 = vld [vmem:[%s274] sm:$0xff]
      %v284 = vld [vmem:[%s274 + $0x8] sm:$0xff]
      %v285 = vld [vmem:[%s274 + $0x10] sm:$0xff]
      %v286 = vld [vmem:[%s274 + $0x18] sm:$0xff]
      %v287 = vld [vmem:[%s274 + $0x20] sm:$0xff]
      %v288 = vld [vmem:[%s274 + $0x28] sm:$0xff]
      %v289 = vld [vmem:[%s274 + $0x30] sm:$0xff]
      %v290 = vld [vmem:[%s274 + $0x38] sm:$0xff]
      %v291 = vld [vmem:[%s274 + $0x40] sm:$0xff]
      %v292 = vld [vmem:[%s274 + $0x48] sm:$0xff]
      %v293 = vld [vmem:[%s274 + $0x50] sm:$0xff]
      %v294 = vld [vmem:[%s274 + $0x58] sm:$0xff]
      %v295 = vld [vmem:[%s274 + $0x60] sm:$0xff]
      %v296 = vld [vmem:[%s274 + $0x68] sm:$0xff]
      %v297 = vld [vmem:[%s274 + $0x70] sm:$0xff]
      %v298 = vld [vmem:[%s274 + $0x78] sm:$0xff]
      %v299 = vpack.c.bf16 %v284, %v283
      %v300 = vpack.c.bf16 %v286, %v285
      %v301 = vpack.c.bf16 %v288, %v287
      %v302 = vpack.c.bf16 %v290, %v289
      %v303 = vpack.c.bf16 %v292, %v291
      %v304 = vpack.c.bf16 %v294, %v293
      %v305 = vpack.c.bf16 %v296, %v295
      %v306 = vpack.c.bf16 %v298, %v297
      %v307 = vld [vmem:[%s1] sm:$0xf]
      %v308 = vld [vmem:[%s1 + $0x4] sm:$0xf]
      %v309 = vld [vmem:[%s1 + $0x8] sm:$0xf]
      %v310 = vld [vmem:[%s1 + $0xc] sm:$0xf]
      %v311 = vld [vmem:[%s2] sm:$0x1]
      %v313 = vlaneseq
      %v314 = vshrl.u32 %v313, 7
      %v315 = vsub.s32 0, %v314
      %v316 = vrot.slane %v311, %v315
      %v322 = vunpack.c.l.b16 %v307
      %v323 = vunpack.c.l.b16 %v308
      %v324 = vunpack.c.l.b16 %v309
      %v325 = vunpack.c.l.b16 %v310
      %v326 = vpack.c.b16 %v323, %v322
      %v327 = vpack.c.b16 %v325, %v324
      %vm330 = vcmask 261120
      %v332 = vsel %vm330, %v299, 0
      %v335 = vsel %vm330, %v300, 0
      %v338 = vsel %vm330, %v301, 0
      %v341 = vsel %vm330, %v302, 0
      %v344 = vsel %vm330, %v303, 0
      %v347 = vsel %vm330, %v304, 0
      %v350 = vsel %vm330, %v305, 0
      %v353 = vsel %vm330, %v306, 0
      %355 = vmatprep.subr.bf16.mxu0 0
      %356 = vmatpush1.bf16.msra.mxu0 %v326
      %357 = vmatprep.subr.bf16.mxu0 0
      %358 = vmatpush1.bf16.msra.mxu0 %v327
      %359 = vmatprep.subr.bf16.mxu0 0
      %360 = vmatpush1.bf16.msra.mxu0 0
      %361 = vmatprep.subr.bf16.mxu0 0
      %362 = vmatpush1.bf16.msra.mxu0 0
      %363 = vmatprep.subr.bf16.mxu0 0
      %364 = vmatpush1.bf16.msra.mxu0 0
      %365 = vmatprep.subr.bf16.mxu0 0
      %366 = vmatpush1.bf16.msra.mxu0 0
      %367 = vmatprep.subr.bf16.mxu0 0
      %368 = vmatpush1.bf16.msra.mxu0 0
      %369 = vmatprep.subr.bf16.mxu0 0
      %370 = vmatpush1.bf16.msra.mxu0 0
      %371 = vmatprep.subr.bf16.mxu0 0
      %372 = vmatpush1.bf16.msra.mxu0 0
      %373 = vmatprep.subr.bf16.mxu0 0
      %374 = vmatpush1.bf16.msra.mxu0 0
      %375 = vmatprep.subr.bf16.mxu0 0
      %376 = vmatpush1.bf16.msra.mxu0 0
      %377 = vmatprep.subr.bf16.mxu0 0
      %378 = vmatpush1.bf16.msra.mxu0 0
      %379 = vmatprep.subr.bf16.mxu0 0
      %380 = vmatpush1.bf16.msra.mxu0 0
      %381 = vmatprep.subr.bf16.mxu0 0
      %382 = vmatpush1.bf16.msra.mxu0 0
      %383 = vmatprep.subr.bf16.mxu0 0
      %384 = vmatpush1.bf16.msra.mxu0 0
      %385 = vmatprep.subr.bf16.mxu0 0
      %386 = vmatpush1.bf16.msra.mxu0 0
      %387 = vmatprep.mubr.bf16.mxu0 0
      %388 = vmatmul.mubr.bf16.gmra.mrb[0].mxu0 %v332
      %v389 = vpop.f32.mrb[0].mxu0
      %v390 = vadd.f32 %v316, %v389
      %v391 = vpop.f32.mrb[0].mxu0
      %v392 = vpop.f32.mrb[0].mxu0
      %v393 = vadd.f32 %v316, %v392
      %v394 = vpop.f32.mrb[0].mxu0
      %395 = vmatprep.mubr.bf16.mxu0 0
      %396 = vmatmul.mubr.bf16.gmra.mrb[0].mxu0 %v335
      %v397 = vpop.f32.mrb[0].mxu0
      %v398 = vadd.f32 %v316, %v397
      %v399 = vpop.f32.mrb[0].mxu0
      %v400 = vpop.f32.mrb[0].mxu0
      %v401 = vadd.f32 %v316, %v400
      %v402 = vpop.f32.mrb[0].mxu0
      %403 = vmatprep.mubr.bf16.mxu0 0
      %404 = vmatmul.mubr.bf16.gmra.mrb[0].mxu0 %v338
      %v405 = vpop.f32.mrb[0].mxu0
      %v406 = vadd.f32 %v316, %v405
      %v407 = vpop.f32.mrb[0].mxu0
      %v408 = vpop.f32.mrb[0].mxu0
      %v409 = vadd.f32 %v316, %v408
      %v410 = vpop.f32.mrb[0].mxu0
      %411 = vmatprep.mubr.bf16.mxu0 0
      %412 = vmatmul.mubr.bf16.gmra.mrb[0].mxu0 %v341
      %v413 = vpop.f32.mrb[0].mxu0
      %v414 = vadd.f32 %v316, %v413
      %v415 = vpop.f32.mrb[0].mxu0
      %v416 = vpop.f32.mrb[0].mxu0
      %v417 = vadd.f32 %v316, %v416
      %v418 = vpop.f32.mrb[0].mxu0
      %419 = vmatprep.mubr.bf16.mxu0 0
      %420 = vmatmul.mubr.bf16.gmra.mrb[0].mxu0 %v344
      %v421 = vpop.f32.mrb[0].mxu0
      %v422 = vadd.f32 %v316, %v421
      %v423 = vpop.f32.mrb[0].mxu0
      %v424 = vpop.f32.mrb[0].mxu0
      %v425 = vadd.f32 %v316, %v424
      %v426 = vpop.f32.mrb[0].mxu0
      %427 = vmatprep.mubr.bf16.mxu0 0
      %428 = vmatmul.mubr.bf16.gmra.mrb[0].mxu0 %v347
      %v429 = vpop.f32.mrb[0].mxu0
      %v430 = vadd.f32 %v316, %v429
      %v431 = vpop.f32.mrb[0].mxu0
      %v432 = vpop.f32.mrb[0].mxu0
      %v433 = vadd.f32 %v316, %v432
      %v434 = vpop.f32.mrb[0].mxu0
      %435 = vmatprep.mubr.bf16.mxu0 0
      %436 = vmatmul.mubr.bf16.gmra.mrb[0].mxu0 %v350
      %v437 = vpop.f32.mrb[0].mxu0
      %v438 = vadd.f32 %v316, %v437
      %v439 = vpop.f32.mrb[0].mxu0
      %v440 = vpop.f32.mrb[0].mxu0
      %v441 = vadd.f32 %v316, %v440
      %v442 = vpop.f32.mrb[0].mxu0
      %443 = vmatprep.mubr.bf16.mxu0 0
      %444 = vmatmul.mubr.bf16.gmra.mrb[0].mxu0 %v353
      %v445 = vpop.f32.mrb[0].mxu0
      %v446 = vadd.f32 %v316, %v445
      %v447 = vpop.f32.mrb[0].mxu0
      %v448 = vpop.f32.mrb[0].mxu0
      %v449 = vadd.f32 %v316, %v448
      %v450 = vpop.f32.mrb[0].mxu0
      %451 = vdwg.mxu0
      %v452 = vmul.f32 %v390, 0.01
      %v453 = vmul.f32 %v393, 0.01
      %v454 = vmul.f32 %v398, 0.01
      %v455 = vmul.f32 %v401, 0.01
      %v456 = vmul.f32 %v406, 0.01
      %v457 = vmul.f32 %v409, 0.01
      %v458 = vmul.f32 %v414, 0.01
      %v459 = vmul.f32 %v417, 0.01
      %v460 = vmul.f32 %v422, 0.01
      %v461 = vmul.f32 %v425, 0.01
      %v462 = vmul.f32 %v430, 0.01
      %v463 = vmul.f32 %v433, 0.01
      %v464 = vmul.f32 %v438, 0.01
      %v465 = vmul.f32 %v441, 0.01
      %v466 = vmul.f32 %v446, 0.01
      %v467 = vmul.f32 %v449, 0.01
      %v468 = vmax.f32 %v390, %v452
      %v469 = vmax.f32 %v393, %v453
      %v470 = vmax.f32 %v398, %v454
      %v471 = vmax.f32 %v401, %v455
      %v472 = vmax.f32 %v406, %v456
      %v473 = vmax.f32 %v409, %v457
      %v474 = vmax.f32 %v414, %v458
      %v475 = vmax.f32 %v417, %v459
      %v476 = vmax.f32 %v422, %v460
      %v477 = vmax.f32 %v425, %v461
      %v478 = vmax.f32 %v430, %v462
      %v479 = vmax.f32 %v433, %v463
      %v480 = vmax.f32 %v438, %v464
      %v481 = vmax.f32 %v441, %v465
      %v482 = vmax.f32 %v446, %v466
      %v483 = vmax.f32 %v449, %v467
      %v484 = vpack.c.bf16 %v469, %v468
      %v485 = vpack.c.bf16 %v471, %v470
      %v486 = vpack.c.bf16 %v473, %v472
      %v487 = vpack.c.bf16 %v475, %v474
      %v488 = vpack.c.bf16 %v477, %v476
      %v489 = vpack.c.bf16 %v479, %v478
      %v490 = vpack.c.bf16 %v481, %v480
      %v491 = vpack.c.bf16 %v483, %v482
      %v492 = vld [vmem:[%s3] sm:$0xf]
      %v493 = vld [vmem:[%s3 + $0x4] sm:$0xf]
      %v494 = vld [vmem:[%s3 + $0x8] sm:$0xf]
      %v495 = vld [vmem:[%s3 + $0xc] sm:$0xf]
      %v496 = vld [vmem:[%s3 + $0x10] sm:$0xf]
      %v497 = vld [vmem:[%s3 + $0x14] sm:$0xf]
      %v498 = vld [vmem:[%s3 + $0x18] sm:$0xf]
      %v499 = vld [vmem:[%s3 + $0x1c] sm:$0xf]
      %v500 = vld [vmem:[%s3 + $0x20] sm:$0xf]
      %v501 = vld [vmem:[%s3 + $0x24] sm:$0xf]
      %v502 = vld [vmem:[%s3 + $0x28] sm:$0xf]
      %v503 = vld [vmem:[%s3 + $0x2c] sm:$0xf]
      %v504 = vld [vmem:[%s3 + $0x30] sm:$0xf]
      %v505 = vld [vmem:[%s3 + $0x34] sm:$0xf]
      %v506 = vld [vmem:[%s3 + $0x38] sm:$0xf]
      %v507 = vld [vmem:[%s3 + $0x3c] sm:$0xf]
      %v508 = vld [vmem:[%s4] sm:$0x1]
      %v509 = vlaneseq
      %v510 = vshrl.u32 %v509, 7
      %v511 = vsub.s32 0, %v510
      %v512 = vrot.slane %v508, %v511
      %v529 = vunpack.c.l.b16 %v492
      %v530 = vunpack.c.l.b16 %v493
      %v531 = vunpack.c.l.b16 %v494
      %v532 = vunpack.c.l.b16 %v495
      %v533 = vunpack.c.l.b16 %v496
      %v534 = vunpack.c.l.b16 %v497
      %v535 = vunpack.c.l.b16 %v498
      %v536 = vunpack.c.l.b16 %v499
      %v537 = vunpack.c.l.b16 %v500
      %v538 = vunpack.c.l.b16 %v501
      %v539 = vunpack.c.l.b16 %v502
      %v540 = vunpack.c.l.b16 %v503
      %v541 = vunpack.c.l.b16 %v504
      %v542 = vunpack.c.l.b16 %v505
      %v543 = vunpack.c.l.b16 %v506
      %v544 = vunpack.c.l.b16 %v507
      %v545 = vpack.c.b16 %v530, %v529
      %v546 = vpack.c.b16 %v532, %v531
      %v547 = vpack.c.b16 %v534, %v533
      %v548 = vpack.c.b16 %v536, %v535
      %v549 = vpack.c.b16 %v538, %v537
      %v550 = vpack.c.b16 %v540, %v539
      %v551 = vpack.c.b16 %v542, %v541
      %v552 = vpack.c.b16 %v544, %v543
      %561 = vmatprep.subr.bf16.mxu0 0
      %562 = vmatpush1.bf16.msra.mxu0 %v545
      %563 = vmatprep.subr.bf16.mxu0 0
      %564 = vmatpush1.bf16.msra.mxu0 %v546
      %565 = vmatprep.subr.bf16.mxu0 0
      %566 = vmatpush1.bf16.msra.mxu0 %v547
      %567 = vmatprep.subr.bf16.mxu0 0
      %568 = vmatpush1.bf16.msra.mxu0 %v548
      %569 = vmatprep.subr.bf16.mxu0 0
      %570 = vmatpush1.bf16.msra.mxu0 %v549
      %571 = vmatprep.subr.bf16.mxu0 0
      %572 = vmatpush1.bf16.msra.mxu0 %v550
      %573 = vmatprep.subr.bf16.mxu0 0
      %574 = vmatpush1.bf16.msra.mxu0 %v551
      %575 = vmatprep.subr.bf16.mxu0 0
      %576 = vmatpush1.bf16.msra.mxu0 %v552
      %577 = vmatprep.subr.bf16.mxu0 0
      %578 = vmatpush1.bf16.msra.mxu0 0
      %579 = vmatprep.subr.bf16.mxu0 0
      %580 = vmatpush1.bf16.msra.mxu0 0
      %581 = vmatprep.subr.bf16.mxu0 0
      %582 = vmatpush1.bf16.msra.mxu0 0
      %583 = vmatprep.subr.bf16.mxu0 0
      %584 = vmatpush1.bf16.msra.mxu0 0
      %585 = vmatprep.subr.bf16.mxu0 0
      %586 = vmatpush1.bf16.msra.mxu0 0
      %587 = vmatprep.subr.bf16.mxu0 0
      %588 = vmatpush1.bf16.msra.mxu0 0
      %589 = vmatprep.subr.bf16.mxu0 0
      %590 = vmatpush1.bf16.msra.mxu0 0
      %591 = vmatprep.subr.bf16.mxu0 0
      %592 = vmatpush1.bf16.msra.mxu0 0
      %593 = vmatprep.mubr.bf16.mxu0 0
      %594 = vmatmul.mubr.bf16.gmra.mrb[0].mxu0 %v484
      %v595 = vpop.f32.mrb[0].mxu0
      %v596 = vadd.f32 %v512, %v595
      %v597 = vpop.f32.mrb[0].mxu0
      %v598 = vpop.f32.mrb[0].mxu0
      %v599 = vadd.f32 %v512, %v598
      %v600 = vpop.f32.mrb[0].mxu0
      %601 = vmatprep.mubr.bf16.mxu0 0
      %602 = vmatmul.mubr.bf16.gmra.mrb[0].mxu0 %v485
      %v603 = vpop.f32.mrb[0].mxu0
      %v604 = vadd.f32 %v512, %v603
      %v605 = vpop.f32.mrb[0].mxu0
      %v606 = vpop.f32.mrb[0].mxu0
      %v607 = vadd.f32 %v512, %v606
      %v608 = vpop.f32.mrb[0].mxu0
      %609 = vmatprep.mubr.bf16.mxu0 0
      %610 = vmatmul.mubr.bf16.gmra.mrb[0].mxu0 %v486
      %v611 = vpop.f32.mrb[0].mxu0
      %v612 = vadd.f32 %v512, %v611
      %v613 = vpop.f32.mrb[0].mxu0
      %v614 = vpop.f32.mrb[0].mxu0
      %v615 = vadd.f32 %v512, %v614
      %v616 = vpop.f32.mrb[0].mxu0
      %617 = vmatprep.mubr.bf16.mxu0 0
      %618 = vmatmul.mubr.bf16.gmra.mrb[0].mxu0 %v487
      %v619 = vpop.f32.mrb[0].mxu0
      %v620 = vadd.f32 %v512, %v619
      %v621 = vpop.f32.mrb[0].mxu0
      %v622 = vpop.f32.mrb[0].mxu0
      %v623 = vadd.f32 %v512, %v622
      %v624 = vpop.f32.mrb[0].mxu0
      %625 = vmatprep.mubr.bf16.mxu0 0
      %626 = vmatmul.mubr.bf16.gmra.mrb[0].mxu0 %v488
      %v627 = vpop.f32.mrb[0].mxu0
      %v628 = vadd.f32 %v512, %v627
      %v629 = vpop.f32.mrb[0].mxu0
      %v630 = vpop.f32.mrb[0].mxu0
      %v631 = vadd.f32 %v512, %v630
      %v632 = vpop.f32.mrb[0].mxu0
      %633 = vmatprep.mubr.bf16.mxu0 0
      %634 = vmatmul.mubr.bf16.gmra.mrb[0].mxu0 %v489
      %v635 = vpop.f32.mrb[0].mxu0
      %v636 = vadd.f32 %v512, %v635
      %v637 = vpop.f32.mrb[0].mxu0
      %v638 = vpop.f32.mrb[0].mxu0
      %v639 = vadd.f32 %v512, %v638
      %v640 = vpop.f32.mrb[0].mxu0
      %641 = vmatprep.mubr.bf16.mxu0 0
      %642 = vmatmul.mubr.bf16.gmra.mrb[0].mxu0 %v490
      %v643 = vpop.f32.mrb[0].mxu0
      %v644 = vadd.f32 %v512, %v643
      %v645 = vpop.f32.mrb[0].mxu0
      %v646 = vpop.f32.mrb[0].mxu0
      %v647 = vadd.f32 %v512, %v646
      %v648 = vpop.f32.mrb[0].mxu0
      %649 = vmatprep.mubr.bf16.mxu0 0
      %650 = vmatmul.mubr.bf16.gmra.mrb[0].mxu0 %v491
      %v651 = vpop.f32.mrb[0].mxu0
      %v652 = vadd.f32 %v512, %v651
      %v653 = vpop.f32.mrb[0].mxu0
      %v654 = vpop.f32.mrb[0].mxu0
      %v655 = vadd.f32 %v512, %v654
      %v656 = vpop.f32.mrb[0].mxu0
      %657 = vdwg.mxu0
      %v658 = vmul.f32 %v596, 0.01
      %v659 = vmul.f32 %v599, 0.01
      %v660 = vmul.f32 %v604, 0.01
      %v661 = vmul.f32 %v607, 0.01
      %v662 = vmul.f32 %v612, 0.01
      %v663 = vmul.f32 %v615, 0.01
      %v664 = vmul.f32 %v620, 0.01
      %v665 = vmul.f32 %v623, 0.01
      %v666 = vmul.f32 %v628, 0.01
      %v667 = vmul.f32 %v631, 0.01
      %v668 = vmul.f32 %v636, 0.01
      %v669 = vmul.f32 %v639, 0.01
      %v670 = vmul.f32 %v644, 0.01
      %v671 = vmul.f32 %v647, 0.01
      %v672 = vmul.f32 %v652, 0.01
      %v673 = vmul.f32 %v655, 0.01
      %v674 = vmax.f32 %v596, %v658
      %v675 = vmax.f32 %v599, %v659
      %v676 = vmax.f32 %v604, %v660
      %v677 = vmax.f32 %v607, %v661
      %v678 = vmax.f32 %v612, %v662
      %v679 = vmax.f32 %v615, %v663
      %v680 = vmax.f32 %v620, %v664
      %v681 = vmax.f32 %v623, %v665
      %v682 = vmax.f32 %v628, %v666
      %v683 = vmax.f32 %v631, %v667
      %v684 = vmax.f32 %v636, %v668
      %v685 = vmax.f32 %v639, %v669
      %v686 = vmax.f32 %v644, %v670
      %v687 = vmax.f32 %v647, %v671
      %v688 = vmax.f32 %v652, %v672
      %v689 = vmax.f32 %v655, %v673
      %v690 = vpack.c.bf16 %v675, %v674
      %v691 = vpack.c.bf16 %v677, %v676
      %v692 = vpack.c.bf16 %v679, %v678
      %v693 = vpack.c.bf16 %v681, %v680
      %v694 = vpack.c.bf16 %v683, %v682
      %v695 = vpack.c.bf16 %v685, %v684
      %v696 = vpack.c.bf16 %v687, %v686
      %v697 = vpack.c.bf16 %v689, %v688
      %s698 = scalar_lea.vmem %s3, 64
      %v699 = vld [vmem:[%s698] sm:$0xf]
      %v700 = vld [vmem:[%s698 + $0x4] sm:$0xf]
      %v701 = vld [vmem:[%s698 + $0x8] sm:$0xf]
      %v702 = vld [vmem:[%s698 + $0xc] sm:$0xf]
      %v703 = vld [vmem:[%s698 + $0x10] sm:$0xf]
      %v704 = vld [vmem:[%s698 + $0x14] sm:$0xf]
      %v705 = vld [vmem:[%s698 + $0x18] sm:$0xf]
      %v706 = vld [vmem:[%s698 + $0x1c] sm:$0xf]
      %v707 = vld [vmem:[%s698 + $0x20] sm:$0xf]
      %v708 = vld [vmem:[%s698 + $0x24] sm:$0xf]
      %v709 = vld [vmem:[%s698 + $0x28] sm:$0xf]
      %v710 = vld [vmem:[%s698 + $0x2c] sm:$0xf]
      %v711 = vld [vmem:[%s698 + $0x30] sm:$0xf]
      %v712 = vld [vmem:[%s698 + $0x34] sm:$0xf]
      %v713 = vld [vmem:[%s698 + $0x38] sm:$0xf]
      %v714 = vld [vmem:[%s698 + $0x3c] sm:$0xf]
      %v715 = vld [vmem:[%s4 + $0x1] sm:$0x1]
      %v716 = vlaneseq
      %v717 = vshrl.u32 %v716, 7
      %v718 = vsub.s32 0, %v717
      %v719 = vrot.slane %v715, %v718
      %v736 = vunpack.c.l.b16 %v699
      %v737 = vunpack.c.l.b16 %v700
      %v738 = vunpack.c.l.b16 %v701
      %v739 = vunpack.c.l.b16 %v702
      %v740 = vunpack.c.l.b16 %v703
      %v741 = vunpack.c.l.b16 %v704
      %v742 = vunpack.c.l.b16 %v705
      %v743 = vunpack.c.l.b16 %v706
      %v744 = vunpack.c.l.b16 %v707
      %v745 = vunpack.c.l.b16 %v708
      %v746 = vunpack.c.l.b16 %v709
      %v747 = vunpack.c.l.b16 %v710
      %v748 = vunpack.c.l.b16 %v711
      %v749 = vunpack.c.l.b16 %v712
      %v750 = vunpack.c.l.b16 %v713
      %v751 = vunpack.c.l.b16 %v714
      %v752 = vpack.c.b16 %v737, %v736
      %v753 = vpack.c.b16 %v739, %v738
      %v754 = vpack.c.b16 %v741, %v740
      %v755 = vpack.c.b16 %v743, %v742
      %v756 = vpack.c.b16 %v745, %v744
      %v757 = vpack.c.b16 %v747, %v746
      %v758 = vpack.c.b16 %v749, %v748
      %v759 = vpack.c.b16 %v751, %v750
      %768 = vmatprep.subr.bf16.mxu0 0
      %769 = vmatpush1.bf16.msra.mxu0 %v752
      %770 = vmatprep.subr.bf16.mxu0 0
      %771 = vmatpush1.bf16.msra.mxu0 %v753
      %772 = vmatprep.subr.bf16.mxu0 0
      %773 = vmatpush1.bf16.msra.mxu0 %v754
      %774 = vmatprep.subr.bf16.mxu0 0
      %775 = vmatpush1.bf16.msra.mxu0 %v755
      %776 = vmatprep.subr.bf16.mxu0 0
      %777 = vmatpush1.bf16.msra.mxu0 %v756
      %778 = vmatprep.subr.bf16.mxu0 0
      %779 = vmatpush1.bf16.msra.mxu0 %v757
      %780 = vmatprep.subr.bf16.mxu0 0
      %781 = vmatpush1.bf16.msra.mxu0 %v758
      %782 = vmatprep.subr.bf16.mxu0 0
      %783 = vmatpush1.bf16.msra.mxu0 %v759
      %784 = vmatprep.subr.bf16.mxu0 0
      %785 = vmatpush1.bf16.msra.mxu0 0
      %786 = vmatprep.subr.bf16.mxu0 0
      %787 = vmatpush1.bf16.msra.mxu0 0
      %788 = vmatprep.subr.bf16.mxu0 0
      %789 = vmatpush1.bf16.msra.mxu0 0
      %790 = vmatprep.subr.bf16.mxu0 0
      %791 = vmatpush1.bf16.msra.mxu0 0
      %792 = vmatprep.subr.bf16.mxu0 0
      %793 = vmatpush1.bf16.msra.mxu0 0
      %794 = vmatprep.subr.bf16.mxu0 0
      %795 = vmatpush1.bf16.msra.mxu0 0
      %796 = vmatprep.subr.bf16.mxu0 0
      %797 = vmatpush1.bf16.msra.mxu0 0
      %798 = vmatprep.subr.bf16.mxu0 0
      %799 = vmatpush1.bf16.msra.mxu0 0
      %800 = vmatprep.mubr.bf16.mxu0 0
      %801 = vmatmul.mubr.bf16.gmra.mrb[0].mxu0 %v690
      %v802 = vpop.f32.mrb[0].mxu0
      %v803 = vadd.f32 %v719, %v802
      %v804 = vpop.f32.mrb[0].mxu0
      %v805 = vpop.f32.mrb[0].mxu0
      %v806 = vadd.f32 %v719, %v805
      %v807 = vpop.f32.mrb[0].mxu0
      %808 = vmatprep.mubr.bf16.mxu0 0
      %809 = vmatmul.mubr.bf16.gmra.mrb[0].mxu0 %v691
      %v810 = vpop.f32.mrb[0].mxu0
      %v811 = vadd.f32 %v719, %v810
      %v812 = vpop.f32.mrb[0].mxu0
      %v813 = vpop.f32.mrb[0].mxu0
      %v814 = vadd.f32 %v719, %v813
      %v815 = vpop.f32.mrb[0].mxu0
      %816 = vmatprep.mubr.bf16.mxu0 0
      %817 = vmatmul.mubr.bf16.gmra.mrb[0].mxu0 %v692
      %v818 = vpop.f32.mrb[0].mxu0
      %v819 = vadd.f32 %v719, %v818
      %v820 = vpop.f32.mrb[0].mxu0
      %v821 = vpop.f32.mrb[0].mxu0
      %v822 = vadd.f32 %v719, %v821
      %v823 = vpop.f32.mrb[0].mxu0
      %824 = vmatprep.mubr.bf16.mxu0 0
      %825 = vmatmul.mubr.bf16.gmra.mrb[0].mxu0 %v693
      %v826 = vpop.f32.mrb[0].mxu0
      %v827 = vadd.f32 %v719, %v826
      %v828 = vpop.f32.mrb[0].mxu0
      %v829 = vpop.f32.mrb[0].mxu0
      %v830 = vadd.f32 %v719, %v829
      %v831 = vpop.f32.mrb[0].mxu0
      %832 = vmatprep.mubr.bf16.mxu0 0
      %833 = vmatmul.mubr.bf16.gmra.mrb[0].mxu0 %v694
      %v834 = vpop.f32.mrb[0].mxu0
      %v835 = vadd.f32 %v719, %v834
      %v836 = vpop.f32.mrb[0].mxu0
      %v837 = vpop.f32.mrb[0].mxu0
      %v838 = vadd.f32 %v719, %v837
      %v839 = vpop.f32.mrb[0].mxu0
      %840 = vmatprep.mubr.bf16.mxu0 0
      %841 = vmatmul.mubr.bf16.gmra.mrb[0].mxu0 %v695
      %v842 = vpop.f32.mrb[0].mxu0
      %v843 = vadd.f32 %v719, %v842
      %v844 = vpop.f32.mrb[0].mxu0
      %v845 = vpop.f32.mrb[0].mxu0
      %v846 = vadd.f32 %v719, %v845
      %v847 = vpop.f32.mrb[0].mxu0
      %848 = vmatprep.mubr.bf16.mxu0 0
      %849 = vmatmul.mubr.bf16.gmra.mrb[0].mxu0 %v696
      %v850 = vpop.f32.mrb[0].mxu0
      %v851 = vadd.f32 %v719, %v850
      %v852 = vpop.f32.mrb[0].mxu0
      %v853 = vpop.f32.mrb[0].mxu0
      %v854 = vadd.f32 %v719, %v853
      %v855 = vpop.f32.mrb[0].mxu0
      %856 = vmatprep.mubr.bf16.mxu0 0
      %857 = vmatmul.mubr.bf16.gmra.mrb[0].mxu0 %v697
      %v858 = vpop.f32.mrb[0].mxu0
      %v859 = vadd.f32 %v719, %v858
      %v860 = vpop.f32.mrb[0].mxu0
      %v861 = vpop.f32.mrb[0].mxu0
      %v862 = vadd.f32 %v719, %v861
      %v863 = vpop.f32.mrb[0].mxu0
      %864 = vdwg.mxu0
      %v865 = vmul.f32 %v803, 0.01
      %v866 = vmul.f32 %v806, 0.01
      %v867 = vmul.f32 %v811, 0.01
      %v868 = vmul.f32 %v814, 0.01
      %v869 = vmul.f32 %v819, 0.01
      %v870 = vmul.f32 %v822, 0.01
      %v871 = vmul.f32 %v827, 0.01
      %v872 = vmul.f32 %v830, 0.01
      %v873 = vmul.f32 %v835, 0.01
      %v874 = vmul.f32 %v838, 0.01
      %v875 = vmul.f32 %v843, 0.01
      %v876 = vmul.f32 %v846, 0.01
      %v877 = vmul.f32 %v851, 0.01
      %v878 = vmul.f32 %v854, 0.01
      %v879 = vmul.f32 %v859, 0.01
      %v880 = vmul.f32 %v862, 0.01
      %v881 = vmax.f32 %v803, %v865
      %v882 = vmax.f32 %v806, %v866
      %v883 = vmax.f32 %v811, %v867
      %v884 = vmax.f32 %v814, %v868
      %v885 = vmax.f32 %v819, %v869
      %v886 = vmax.f32 %v822, %v870
      %v887 = vmax.f32 %v827, %v871
      %v888 = vmax.f32 %v830, %v872
      %v889 = vmax.f32 %v835, %v873
      %v890 = vmax.f32 %v838, %v874
      %v891 = vmax.f32 %v843, %v875
      %v892 = vmax.f32 %v846, %v876
      %v893 = vmax.f32 %v851, %v877
      %v894 = vmax.f32 %v854, %v878
      %v895 = vmax.f32 %v859, %v879
      %v896 = vmax.f32 %v862, %v880
      %v897 = vpack.c.bf16 %v882, %v881
      %v898 = vpack.c.bf16 %v884, %v883
      %v899 = vpack.c.bf16 %v886, %v885
      %v900 = vpack.c.bf16 %v888, %v887
      %v901 = vpack.c.bf16 %v890, %v889
      %v902 = vpack.c.bf16 %v892, %v891
      %v903 = vpack.c.bf16 %v894, %v893
      %v904 = vpack.c.bf16 %v896, %v895
      %v905 = vld [vmem:[%s5] sm:$0xf]
      %v906 = vld [vmem:[%s5 + $0x4] sm:$0xf]
      %v907 = vld [vmem:[%s5 + $0x8] sm:$0xf]
      %v908 = vld [vmem:[%s5 + $0xc] sm:$0xf]
      %v909 = vld [vmem:[%s5 + $0x10] sm:$0xf]
      %v910 = vld [vmem:[%s5 + $0x14] sm:$0xf]
      %v911 = vld [vmem:[%s5 + $0x18] sm:$0xf]
      %v912 = vld [vmem:[%s5 + $0x1c] sm:$0xf]
      %v913 = vld [vmem:[%s5 + $0x20] sm:$0xf]
      %v914 = vld [vmem:[%s5 + $0x24] sm:$0xf]
      %v915 = vld [vmem:[%s5 + $0x28] sm:$0xf]
      %v916 = vld [vmem:[%s5 + $0x2c] sm:$0xf]
      %v917 = vld [vmem:[%s5 + $0x30] sm:$0xf]
      %v918 = vld [vmem:[%s5 + $0x34] sm:$0xf]
      %v919 = vld [vmem:[%s5 + $0x38] sm:$0xf]
      %v920 = vld [vmem:[%s5 + $0x3c] sm:$0xf]
      %v921 = vld [vmem:[%s6] sm:$0x1]
      %v923 = vlaneseq
      %v924 = vshrl.u32 %v923, 7
      %v925 = vsub.s32 0, %v924
      %v926 = vrot.slane %v921, %v925
      %v944 = vunpack.c.l.b16 %v905
      %v945 = vunpack.c.l.b16 %v906
      %v946 = vunpack.c.l.b16 %v907
      %v947 = vunpack.c.l.b16 %v908
      %v948 = vunpack.c.l.b16 %v909
      %v949 = vunpack.c.l.b16 %v910
      %v950 = vunpack.c.l.b16 %v911
      %v951 = vunpack.c.l.b16 %v912
      %v952 = vunpack.c.l.b16 %v913
      %v953 = vunpack.c.l.b16 %v914
      %v954 = vunpack.c.l.b16 %v915
      %v955 = vunpack.c.l.b16 %v916
      %v956 = vunpack.c.l.b16 %v917
      %v957 = vunpack.c.l.b16 %v918
      %v958 = vunpack.c.l.b16 %v919
      %v959 = vunpack.c.l.b16 %v920
      %v960 = vpack.c.b16 %v945, %v944
      %v961 = vpack.c.b16 %v947, %v946
      %v962 = vpack.c.b16 %v949, %v948
      %v963 = vpack.c.b16 %v951, %v950
      %v964 = vpack.c.b16 %v953, %v952
      %v965 = vpack.c.b16 %v955, %v954
      %v966 = vpack.c.b16 %v957, %v956
      %v967 = vpack.c.b16 %v959, %v958
      %976 = vmatprep.subr.bf16.mxu0 0
      %977 = vmatpush1.bf16.msra.mxu0 %v960
      %978 = vmatprep.subr.bf16.mxu0 0
      %979 = vmatpush1.bf16.msra.mxu0 %v961
      %980 = vmatprep.subr.bf16.mxu0 0
      %981 = vmatpush1.bf16.msra.mxu0 %v962
      %982 = vmatprep.subr.bf16.mxu0 0
      %983 = vmatpush1.bf16.msra.mxu0 %v963
      %984 = vmatprep.subr.bf16.mxu0 0
      %985 = vmatpush1.bf16.msra.mxu0 %v964
      %986 = vmatprep.subr.bf16.mxu0 0
      %987 = vmatpush1.bf16.msra.mxu0 %v965
      %988 = vmatprep.subr.bf16.mxu0 0
      %989 = vmatpush1.bf16.msra.mxu0 %v966
      %990 = vmatprep.subr.bf16.mxu0 0
      %991 = vmatpush1.bf16.msra.mxu0 %v967
      %992 = vmatprep.subr.bf16.mxu0 0
      %993 = vmatpush1.bf16.msra.mxu0 0
      %994 = vmatprep.subr.bf16.mxu0 0
      %995 = vmatpush1.bf16.msra.mxu0 0
      %996 = vmatprep.subr.bf16.mxu0 0
      %997 = vmatpush1.bf16.msra.mxu0 0
      %998 = vmatprep.subr.bf16.mxu0 0
      %999 = vmatpush1.bf16.msra.mxu0 0
      %1000 = vmatprep.subr.bf16.mxu0 0
      %1001 = vmatpush1.bf16.msra.mxu0 0
      %1002 = vmatprep.subr.bf16.mxu0 0
      %1003 = vmatpush1.bf16.msra.mxu0 0
      %1004 = vmatprep.subr.bf16.mxu0 0
      %1005 = vmatpush1.bf16.msra.mxu0 0
      %1006 = vmatprep.subr.bf16.mxu0 0
      %1007 = vmatpush1.bf16.msra.mxu0 0
      %1008 = vmatprep.mubr.bf16.mxu0 0
      %1009 = vmatmul.mubr.bf16.gmra.mrb[0].mxu0 %v897
      %v1010 = vpop.f32.mrb[0].mxu0
      %v1011 = vadd.f32 %v926, %v1010
      %v1012 = vpop.f32.mrb[0].mxu0
      %v1013 = vpop.f32.mrb[0].mxu0
      %v1014 = vadd.f32 %v926, %v1013
      %v1015 = vpop.f32.mrb[0].mxu0
      %1016 = vmatprep.mubr.bf16.mxu0 0
      %1017 = vmatmul.mubr.bf16.gmra.mrb[0].mxu0 %v898
      %v1018 = vpop.f32.mrb[0].mxu0
      %v1019 = vadd.f32 %v926, %v1018
      %v1020 = vpop.f32.mrb[0].mxu0
      %v1021 = vpop.f32.mrb[0].mxu0
      %v1022 = vadd.f32 %v926, %v1021
      %v1023 = vpop.f32.mrb[0].mxu0
      %1024 = vmatprep.mubr.bf16.mxu0 0
      %1025 = vmatmul.mubr.bf16.gmra.mrb[0].mxu0 %v899
      %v1026 = vpop.f32.mrb[0].mxu0
      %v1027 = vadd.f32 %v926, %v1026
      %v1028 = vpop.f32.mrb[0].mxu0
      %v1029 = vpop.f32.mrb[0].mxu0
      %v1030 = vadd.f32 %v926, %v1029
      %v1031 = vpop.f32.mrb[0].mxu0
      %1032 = vmatprep.mubr.bf16.mxu0 0
      %1033 = vmatmul.mubr.bf16.gmra.mrb[0].mxu0 %v900
      %v1034 = vpop.f32.mrb[0].mxu0
      %v1035 = vadd.f32 %v926, %v1034
      %v1036 = vpop.f32.mrb[0].mxu0
      %v1037 = vpop.f32.mrb[0].mxu0
      %v1038 = vadd.f32 %v926, %v1037
      %v1039 = vpop.f32.mrb[0].mxu0
      %1040 = vmatprep.mubr.bf16.mxu0 0
      %1041 = vmatmul.mubr.bf16.gmra.mrb[0].mxu0 %v901
      %v1042 = vpop.f32.mrb[0].mxu0
      %v1043 = vadd.f32 %v926, %v1042
      %v1044 = vpop.f32.mrb[0].mxu0
      %v1045 = vpop.f32.mrb[0].mxu0
      %v1046 = vadd.f32 %v926, %v1045
      %v1047 = vpop.f32.mrb[0].mxu0
      %1048 = vmatprep.mubr.bf16.mxu0 0
      %1049 = vmatmul.mubr.bf16.gmra.mrb[0].mxu0 %v902
      %v1050 = vpop.f32.mrb[0].mxu0
      %v1051 = vadd.f32 %v926, %v1050
      %v1052 = vpop.f32.mrb[0].mxu0
      %v1053 = vpop.f32.mrb[0].mxu0
      %v1054 = vadd.f32 %v926, %v1053
      %v1055 = vpop.f32.mrb[0].mxu0
      %1056 = vmatprep.mubr.bf16.mxu0 0
      %1057 = vmatmul.mubr.bf16.gmra.mrb[0].mxu0 %v903
      %v1058 = vpop.f32.mrb[0].mxu0
      %v1059 = vadd.f32 %v926, %v1058
      %v1060 = vpop.f32.mrb[0].mxu0
      %v1061 = vpop.f32.mrb[0].mxu0
      %v1062 = vadd.f32 %v926, %v1061
      %v1063 = vpop.f32.mrb[0].mxu0
      %1064 = vmatprep.mubr.bf16.mxu0 0
      %1065 = vmatmul.mubr.bf16.gmra.mrb[0].mxu0 %v904
      %v1066 = vpop.f32.mrb[0].mxu0
      %v1067 = vadd.f32 %v926, %v1066
      %v1068 = vpop.f32.mrb[0].mxu0
      %v1069 = vpop.f32.mrb[0].mxu0
      %v1070 = vadd.f32 %v926, %v1069
      %v1071 = vpop.f32.mrb[0].mxu0
      %1072 = vdwg.mxu0
      %vm1073 = vcmask 130048
      %1074 = vst.msk [vmem:[%s280] sm:$0xff] %vm1073, %v1011
      %1075 = vst.msk [vmem:[%s280 + $0x8] sm:$0xff] %vm1073, %v1014
      %1076 = vst.msk [vmem:[%s280 + $0x10] sm:$0xff] %vm1073, %v1019
      %1077 = vst.msk [vmem:[%s280 + $0x18] sm:$0xff] %vm1073, %v1022
      %1078 = vst.msk [vmem:[%s280 + $0x20] sm:$0xff] %vm1073, %v1027
      %1079 = vst.msk [vmem:[%s280 + $0x28] sm:$0xff] %vm1073, %v1030
      %1080 = vst.msk [vmem:[%s280 + $0x30] sm:$0xff] %vm1073, %v1035
      %1081 = vst.msk [vmem:[%s280 + $0x38] sm:$0xff] %vm1073, %v1038
      %1082 = vst.msk [vmem:[%s280 + $0x40] sm:$0xff] %vm1073, %v1043
      %1083 = vst.msk [vmem:[%s280 + $0x48] sm:$0xff] %vm1073, %v1046
      %1084 = vst.msk [vmem:[%s280 + $0x50] sm:$0xff] %vm1073, %v1051
      %1085 = vst.msk [vmem:[%s280 + $0x58] sm:$0xff] %vm1073, %v1054
      %1086 = vst.msk [vmem:[%s280 + $0x60] sm:$0xff] %vm1073, %v1059
      %1087 = vst.msk [vmem:[%s280 + $0x68] sm:$0xff] %vm1073, %v1062
      %1088 = vst.msk [vmem:[%s280 + $0x70] sm:$0xff] %vm1073, %v1067
      %1089 = vst.msk [vmem:[%s280 + $0x78] sm:$0xff] %vm1073, %v1070
      %s1090 = smul.u32 16, %s18
      %p1091 = scmp.lt.s32.totalorder %s1090, 63
      %s1092 = scalar_select %p1091, %s1090, 63
      %s1093 = smul.addr %s1092, 8
      %s1094 = scalar_lea.vmem %s7, %s1093
      // Predicated region
      $region49: #{tpu_custom_call.1} parent=47 // pred_check
        %p1095 = pneg %p188
      $region50: #{tpu_custom_call.1} parent=47 // pred_check_branch
        %1097 = sbr.rel (%p1095) target = $region52
      $region51: #{tpu_custom_call.1} parent=47 // pred_region
        %s1098 = smul.u32 16, %s18
      $region52: #{tpu_custom_call.1} parent=47 // pred_fallthru
        _
    $region48: #{tpu_custom_call.1} parent=5 // pred_fallthru
      _
    %p1099 = scmp.le.s32.totalorder 2, %s13
    // Predicated region
    $region53: #{tpu_custom_call.1} parent=5 // pred_check
      %p1100 = pneg %p1099
    $region54: #{tpu_custom_call.1} parent=5 // pred_check_branch
      %1102 = sbr.rel (%p1100) target = $region56
    $region55: #{tpu_custom_call.1} parent=5 // pred_region
      %s1103 = ssub.s32 %s13, 2
      // Predicated region
      $region57: #{tpu_custom_call.1} parent=55 // pred_check
        %p1104 = pneg %p194
      $region58: #{tpu_custom_call.1} parent=55 // pred_check_branch
        %1106 = sbr.rel (%p1104) target = $region60
      $region59: #{tpu_custom_call.1} parent=55 // pred_region
        %s1107 = smul.u32 16, %s19
        %p1108 = scmp.lt.s32.totalorder %s1107, 63
        %s1109 = scalar_select %p1108, %s1107, 63
        %s1110 = smul.addr %s1109, 8
        %s1111 = scalar_lea.vmem %s7, %s1110
      $region60: #{tpu_custom_call.1} parent=55 // pred_fallthru
        _
    $region56: #{tpu_custom_call.1} parent=5 // pred_fallthru
      _
  $region6: #{tpu_custom_call.1} parent=0 // loop_footer
    %s17 = sadd.s32 1, %s13
  $region7: #{tpu_custom_call.1} parent=0 // loop_footer_branch
    %12 = sbr.rel target = $region3
  $region8: #{tpu_custom_call.1} parent=0 // loop_exit
    _

</llo_original>
